<compile_context>
chip_gen: v6e
topology: v6e:2x2x1
jax: 0.10.0
libtpu: 0.0.40
codegen_flags: <defaults>
</compile_context>

<pallas_src>
import jax
import jax.numpy as jnp
from jax.experimental import pallas as pl
from jax.experimental.pallas import tpu as pltpu

H1, H2 = 400, 300
H1_P, H2_P = 512, 384   # lane-padded hidden dims (multiples of 128)
LANE = 128


def _round_up(n, m):
    return (n + m - 1) // m * m


def _mlp_kernel(x_ref, w1_ref, b1_ref, w2_ref, b2_ref, w3_ref, b3_ref, o_ref):
    # Layer 1: Linear + ReLU.  Cast the streamed tile to the (possibly bf16)
    # weight dtype in-kernel; accumulation stays f32 on the MXU.
    x = x_ref[...].astype(w1_ref.dtype)
    h1 = jnp.dot(x, w1_ref[...], preferred_element_type=jnp.float32)
    h1 = jnp.maximum(h1 + b1_ref[...], 0.0)
    # Layer 2: Linear + ReLU.
    h2 = jnp.dot(h1.astype(w2_ref.dtype), w2_ref[...],
                 preferred_element_type=jnp.float32)
    h2 = jnp.maximum(h2 + b2_ref[...], 0.0)
    # Layer 3: Linear (no activation), lane-dense store.
    out = jnp.dot(h2.astype(w3_ref.dtype), w3_ref[...],
                  preferred_element_type=jnp.float32)
    o_ref[...] = (out + b3_ref[...]).astype(o_ref.dtype)


def prepare_params(params, compute_dtype=jnp.bfloat16):
    """One-time padding/casting of the weights.  Call at init, NOT per step.

    Weights are stored transposed vs. PyTorch (in, out) so y = x @ W + b.
    Hidden/output dims are zero-padded to lane multiples (exact through
    matmul / bias / ReLU); w1's row count stays num_inputs (matches unpadded x).
    """
    num_inputs = params["w1"].shape[0]
    num_outputs = params["w3"].shape[1]
    out_p = _round_up(num_outputs, LANE)
    cd = compute_dtype
    f32 = jnp.float32
    w1 = jnp.zeros((num_inputs, H1_P), cd).at[:, :H1].set(params["w1"].astype(cd))
    b1 = jnp.zeros((1, H1_P), f32).at[:, :H1].set(params["b1"].astype(f32))
    w2 = jnp.zeros((H1_P, H2_P), cd).at[:H1, :H2].set(params["w2"].astype(cd))
    b2 = jnp.zeros((1, H2_P), f32).at[:, :H2].set(params["b2"].astype(f32))
    w3 = jnp.zeros((H2_P, out_p), cd).at[:H2, :num_outputs].set(params["w3"].astype(cd))
    b3 = jnp.zeros((1, out_p), f32).at[:, :num_outputs].set(params["b3"].astype(f32))
    return {"w1": w1, "b1": b1, "w2": w2, "b2": b2, "w3": w3, "b3": b3,
            "num_outputs": num_outputs}


def _pick_bm(B, max_bm=512):
    """Batch tile: multiple of 8, capped at max_bm, >=2 grid steps when possible."""
    if B <= 8:
        return 8
    return int(min(max_bm, _round_up(pl.cdiv(B, 2), 8)))


def mlp_base_pallas(x, prepared, *, bm=None, max_bm=512, slice_output=True):
    """x: [B, num_inputs] (any float dtype).  prepared: output of prepare_params."""
    B, num_inputs = x.shape
    w1, b1, w2, b2, w3, b3 = (prepared[k] for k in ("w1", "b1", "w2", "b2", "w3", "b3"))
    num_outputs = prepared["num_outputs"]
    out_p = w3.shape[1]
    assert w1.shape[0] == num_inputs, "prepared params do not match x feature dim"

    if bm is None:
        bm = _pick_bm(B, max_bm)

    def resident(shape):
        # Constant-index-map block: never re-fetched, single-buffered.
        return pl.BlockSpec(shape, lambda i: (0, 0), pipeline_mode=pl.Buffered(1))

    out = pl.pallas_call(
        _mlp_kernel,
        out_shape=jax.ShapeDtypeStruct((B, out_p), x.dtype),
        grid_spec=pltpu.PrefetchScalarGridSpec(
            num_scalar_prefetch=0,
            grid=(pl.cdiv(B, bm),),
            in_specs=[
                # Streamed x tile: full (unpadded) feature dim on the lane axis,
                # partial last batch block handled by Pallas.
                pl.BlockSpec((bm, num_inputs), lambda i: (i, 0)),
                resident(w1.shape), resident(b1.shape),
                resident(w2.shape), resident(b2.shape),
                resident(w3.shape), resident(b3.shape),
            ],
            out_specs=pl.BlockSpec((bm, out_p), lambda i: (i, 0)),
        ),
        compiler_params=pltpu.CompilerParams(
            dimension_semantics=("parallel",),
        ),
    )(x, w1, b1, w2, b2, w3, b3)

    if slice_output:
        out = out[:, :num_outputs]
    return out


def init_params(key, num_inputs, num_outputs):
    """Deterministic synthetic params matching nn.Linear shapes (stored transposed)."""
    ks = jax.random.split(key, 6)

    def uniform_linear(kw, kb, fan_in, fan_out):
        # PyTorch default: U(-1/sqrt(fan_in), 1/sqrt(fan_in)) for weight and bias.
        bound = 1.0 / jnp.sqrt(jnp.float32(fan_in))
        w = jax.random.uniform(kw, (fan_in, fan_out), jnp.float32, -bound, bound)
        b = jax.random.uniform(kb, (1, fan_out), jnp.float32, -bound, bound)
        return w, b

    w1, b1 = uniform_linear(ks[0], ks[1], num_inputs, H1)
    w2, b2 = uniform_linear(ks[2], ks[3], H1, H2)
    w3, b3 = uniform_linear(ks[4], ks[5], H2, num_outputs)
    return {"w1": w1, "b1": b1, "w2": w2, "b2": b2, "w3": w3, "b3": b3}


def mlp_base_ref(x, p):
    h1 = jnp.maximum(x @ p["w1"] + p["b1"], 0.0)
    h2 = jnp.maximum(h1 @ p["w2"] + p["b2"], 0.0)
    return h2 @ p["w3"] + p["b3"]


if __name__ == "__main__":
    key = jax.random.PRNGKey(0)
    k_params, k_x = jax.random.split(key)

    batch, num_inputs, num_outputs = 8, 32, 8
    params = init_params(k_params, num_inputs, num_outputs)
    x = jax.random.normal(k_x, (batch, num_inputs), jnp.float32)
    ref = mlp_base_ref(x, params)

    # f32 weights: tight numerical check.
    prep_f32 = prepare_params(params, compute_dtype=jnp.float32)
    out_f32 = jax.block_until_ready(mlp_base_pallas(x, prep_f32))
    assert out_f32.shape == (batch, num_outputs)
    assert jnp.allclose(out_f32, ref, atol=1e-4, rtol=1e-4)

    # bf16 weights / streamed activations (default fast path): f32 accumulation,
    # looser tolerance vs. the f32 reference.
    prep_bf16 = prepare_params(params)  # compute_dtype=bf16 default
    out_bf16 = jax.block_until_ready(mlp_base_pallas(x, prep_bf16))
    assert out_bf16.shape == (batch, num_outputs)
    assert jnp.allclose(out_bf16, ref, atol=5e-2, rtol=5e-2)

    print("KERNEL_OK")
</pallas_src>

<mosaic_0001>
module attributes {stable_mosaic.version = 11 : i64} {
  func.func @_mlp_kernel(%arg0: i32, %arg1: memref<8x32xf32, #tpu.memory_space<vmem>>, %arg2: memref<32x512xf32, #tpu.memory_space<vmem>>, %arg3: memref<1x512xf32, #tpu.memory_space<vmem>>, %arg4: memref<512x384xf32, #tpu.memory_space<vmem>>, %arg5: memref<1x384xf32, #tpu.memory_space<vmem>>, %arg6: memref<384x128xf32, #tpu.memory_space<vmem>>, %arg7: memref<1x128xf32, #tpu.memory_space<vmem>>, %arg8: memref<8x128xf32, #tpu.memory_space<vmem>>) attributes {dimension_semantics = [#tpu.dimension_semantics<parallel>], iteration_bounds = array<i64: 1>, scalar_prefetch = 0 : i64, scratch_operands = 0 : i64, tpu.core_type = #tpu.core_type<tc>, window_params = [{transform_indices = @transform_0, window_bounds = array<i64: 8, 32>}, {pipeline_mode = #tpu.pipeline_mode<synchronous>, transform_indices = @transform_1, window_bounds = array<i64: 32, 512>}, {pipeline_mode = #tpu.pipeline_mode<synchronous>, transform_indices = @transform_2, window_bounds = array<i64: 1, 512>}, {pipeline_mode = #tpu.pipeline_mode<synchronous>, transform_indices = @transform_3, window_bounds = array<i64: 512, 384>}, {pipeline_mode = #tpu.pipeline_mode<synchronous>, transform_indices = @transform_4, window_bounds = array<i64: 1, 384>}, {pipeline_mode = #tpu.pipeline_mode<synchronous>, transform_indices = @transform_5, window_bounds = array<i64: 384, 128>}, {pipeline_mode = #tpu.pipeline_mode<synchronous>, transform_indices = @transform_6, window_bounds = array<i64: 1, 128>}, {transform_indices = @transform_7, window_bounds = array<i64: 8, 128>}]} {
    %c0 = arith.constant 0 : index
    %c0_0 = arith.constant 0 : index
    %0 = vector.load %arg1[%c0, %c0_0] : memref<8x32xf32, #tpu.memory_space<vmem>>, vector<8x32xf32>
    %c0_1 = arith.constant 0 : index
    %c0_2 = arith.constant 0 : index
    %1 = vector.load %arg2[%c0_1, %c0_2] : memref<32x512xf32, #tpu.memory_space<vmem>>, vector<32x512xf32>
    %cst = arith.constant dense<0.000000e+00> : vector<8x512xf32>
    %2 = tpu.matmul %0, %1, %cst {dimension_numbers = #tpu.dot_dimension_numbers<[1], [0], [0], [1], [0, 0, 1, 1], [], []>} : vector<8x32xf32>, vector<32x512xf32>, vector<8x512xf32> -> vector<8x512xf32>
    %c0_3 = arith.constant 0 : index
    %c0_4 = arith.constant 0 : index
    %3 = vector.load %arg3[%c0_3, %c0_4] : memref<1x512xf32, #tpu.memory_space<vmem>>, vector<1x512xf32>
    %4 = vector.broadcast %3 : vector<1x512xf32> to vector<8x512xf32>
    %5 = arith.addf %2, %4 : vector<8x512xf32>
    %cst_5 = arith.constant 0.000000e+00 : f32
    %6 = vector.broadcast %cst_5 : f32 to vector<8x512xf32>
    %7 = arith.maximumf %5, %6 : vector<8x512xf32>
    %c0_6 = arith.constant 0 : index
    %c0_7 = arith.constant 0 : index
    %8 = vector.load %arg4[%c0_6, %c0_7] : memref<512x384xf32, #tpu.memory_space<vmem>>, vector<512x384xf32>
    %cst_8 = arith.constant dense<0.000000e+00> : vector<8x384xf32>
    %9 = tpu.matmul %7, %8, %cst_8 {dimension_numbers = #tpu.dot_dimension_numbers<[1], [0], [0], [1], [0, 0, 1, 1], [], []>} : vector<8x512xf32>, vector<512x384xf32>, vector<8x384xf32> -> vector<8x384xf32>
    %c0_9 = arith.constant 0 : index
    %c0_10 = arith.constant 0 : index
    %10 = vector.load %arg5[%c0_9, %c0_10] : memref<1x384xf32, #tpu.memory_space<vmem>>, vector<1x384xf32>
    %11 = vector.broadcast %10 : vector<1x384xf32> to vector<8x384xf32>
    %12 = arith.addf %9, %11 : vector<8x384xf32>
    %cst_11 = arith.constant 0.000000e+00 : f32
    %13 = vector.broadcast %cst_11 : f32 to vector<8x384xf32>
    %14 = arith.maximumf %12, %13 : vector<8x384xf32>
    %c0_12 = arith.constant 0 : index
    %c0_13 = arith.constant 0 : index
    %15 = vector.load %arg6[%c0_12, %c0_13] : memref<384x128xf32, #tpu.memory_space<vmem>>, vector<384x128xf32>
    %cst_14 = arith.constant dense<0.000000e+00> : vector<8x128xf32>
    %16 = tpu.matmul %14, %15, %cst_14 {dimension_numbers = #tpu.dot_dimension_numbers<[1], [0], [0], [1], [0, 0, 1, 1], [], []>} : vector<8x384xf32>, vector<384x128xf32>, vector<8x128xf32> -> vector<8x128xf32>
    %c0_15 = arith.constant 0 : index
    %c0_16 = arith.constant 0 : index
    %17 = vector.load %arg7[%c0_15, %c0_16] : memref<1x128xf32, #tpu.memory_space<vmem>>, vector<1x128xf32>
    %18 = vector.broadcast %17 : vector<1x128xf32> to vector<8x128xf32>
    %19 = arith.addf %16, %18 : vector<8x128xf32>
    %c0_17 = arith.constant 0 : index
    %c0_18 = arith.constant 0 : index
    %20 = vector.load %arg8[%c0_17, %c0_18] : memref<8x128xf32, #tpu.memory_space<vmem>>, vector<8x128xf32>
    tpu.vector_store %arg8[%c0_17, %c0_18], %19 {strides = array<i32>} : memref<8x128xf32, #tpu.memory_space<vmem>>, vector<8x128xf32>,
    return
  }
  func.func @transform_0(%arg0: i32) -> (i32, i32) {
    %c0_i32 = arith.constant 0 : i32
    %c0_i32_0 = arith.constant 0 : i32
    return %arg0, %c0_i32 : i32, i32
  }
  func.func @transform_1(%arg0: i32) -> (i32, i32) {
    %c0_i32 = arith.constant 0 : i32
    %c0_i32_0 = arith.constant 0 : i32
    %c0_i32_1 = arith.constant 0 : i32
    return %c0_i32, %c0_i32_0 : i32, i32
  }
  func.func @transform_2(%arg0: i32) -> (i32, i32) {
    %c0_i32 = arith.constant 0 : i32
    %c0_i32_0 = arith.constant 0 : i32
    %c0_i32_1 = arith.constant 0 : i32
    return %c0_i32, %c0_i32_0 : i32, i32
  }
  func.func @transform_3(%arg0: i32) -> (i32, i32) {
    %c0_i32 = arith.constant 0 : i32
    %c0_i32_0 = arith.constant 0 : i32
    %c0_i32_1 = arith.constant 0 : i32
    return %c0_i32, %c0_i32_0 : i32, i32
  }
  func.func @transform_4(%arg0: i32) -> (i32, i32) {
    %c0_i32 = arith.constant 0 : i32
    %c0_i32_0 = arith.constant 0 : i32
    %c0_i32_1 = arith.constant 0 : i32
    return %c0_i32, %c0_i32_0 : i32, i32
  }
  func.func @transform_5(%arg0: i32) -> (i32, i32) {
    %c0_i32 = arith.constant 0 : i32
    %c0_i32_0 = arith.constant 0 : i32
    %c0_i32_1 = arith.constant 0 : i32
    return %c0_i32, %c0_i32_0 : i32, i32
  }
  func.func @transform_6(%arg0: i32) -> (i32, i32) {
    %c0_i32 = arith.constant 0 : i32
    %c0_i32_0 = arith.constant 0 : i32
    %c0_i32_1 = arith.constant 0 : i32
    return %c0_i32, %c0_i32_0 : i32, i32
  }
  func.func @transform_7(%arg0: i32) -> (i32, i32) {
    %c0_i32 = arith.constant 0 : i32
    %c0_i32_0 = arith.constant 0 : i32
    return %arg0, %c0_i32 : i32, i32
  }
}

</mosaic_0001>

<llo_original>
// kernel: tpu_custom_call.1
$region0: #{tpu_custom_call.1}
  #allocation0 [shape = 'u32[]', space=smem, size = 0x4, offset = 0x4, fixed_abs, tag = 'smem constant byte address 0x4 - core index']
  #allocation1 [shape = 'u32[144,128]{1,0:T(1,128)}', space=vmem, size = 0x12000, scoped, tag = 'internal scratch']
  %s0 = inlined_call_operand.hbm [shape: f32[8,32], index: 0, kind: input, shape index: {}]
  %s1 = inlined_call_operand.hbm [shape: f32[32,512], index: 1, kind: input, shape index: {}]
  %s2 = inlined_call_operand.hbm [shape: f32[1,512], index: 2, kind: input, shape index: {}]
  %s3 = inlined_call_operand.hbm [shape: f32[512,384], index: 3, kind: input, shape index: {}]
  %s4 = inlined_call_operand.vmem [shape: f32[1,384], index: 4, kind: input, shape index: {}]
  %s5 = inlined_call_operand.hbm [shape: f32[384,128], index: 5, kind: input, shape index: {}]
  %s6 = inlined_call_operand.vmem [shape: f32[1,128], index: 6, kind: input, shape index: {}]
  %s7 = inlined_call_operand.hbm [shape: f32[8,128], index: 7, kind: output, shape index: {}]
  %s8 = sld [smem:[#allocation0]]
  $region58: #{tpu_custom_call.1} parent=0
    _
  %s10 = ssub.s32 1, %s8
  %s11 = scalar_select 0, %s10, %s8
  $region1: #{tpu_custom_call.1} parent=0
    #allocation2 [shape = 'u8[4096]{0}', space=vmem, size = 0x1000, scoped, tag = 'input window, operand 0, single buffered']
    #allocation3 [shape = 's32[1]{0}', space=sflag, size = 0x4, scoped, tag = 'scoped memory for tpu_custom_call.1']
    #allocation4 [shape = 's32[1]{0}', space=sflag, size = 0x4, scoped, tag = 'scoped memory for tpu_custom_call.1']
    #allocation5 [shape = 'u8[65536]{0}', space=vmem, size = 0x10000, scoped, tag = 'input window, operand 1, single buffered']
    #allocation6 [shape = 's32[1]{0}', space=sflag, size = 0x4, scoped, tag = 'scoped memory for tpu_custom_call.1']
    #allocation7 [shape = 'u8[2048]{0}', space=vmem, size = 0x800, scoped, tag = 'input window, operand 2, single buffered']
    #allocation8 [shape = 'u8[786432]{0}', space=vmem, size = 0xc0000, scoped, tag = 'input window, operand 3, single buffered']
    #allocation9 [shape = 's32[1]{0}', space=sflag, size = 0x4, scoped, tag = 'scoped memory for tpu_custom_call.1']
    #allocation10 [shape = 'u8[196608]{0}', space=vmem, size = 0x30000, scoped, tag = 'input window, operand 5, single buffered']
    #allocation11 [shape = 'u8[4096]{0}', space=vmem, size = 0x1000, scoped, tag = 'output window, operand 0, single buffered']
    %12 = vsyncpa [#allocation3], 0
    %13 = vsyncpa [#allocation6], 0
    %14 = vsyncpa [#allocation9], 0
    %15 = vsyncpa [#allocation4], 0
    // Predicated region
    $region2: #{tpu_custom_call.1} parent=1 // pred_check
      _
    $region3: #{tpu_custom_call.1} parent=1 // pred_check_branch
      %17 = sbr.rel (0) target = $region5
    $region4: #{tpu_custom_call.1} parent=1 // pred_region
      %s19 = ssub.s32 128, 128
      %20 = vsyncadd [#allocation3], %s19
      %s22 = sshll.u32 [#allocation2], 4
      %s23 = int_to_ptr.vmem [resolvable:$true] %s22
      %25 = dma.hbm_to_vmem [thread:$0]  %s0, 128, %s23, [#allocation3]
    $region5: #{tpu_custom_call.1} parent=1 // pred_fallthru
      _
    // Predicated region
    $region6: #{tpu_custom_call.1} parent=1 // pred_check
      _
    $region7: #{tpu_custom_call.1} parent=1 // pred_check_branch
      %27 = sbr.rel (0) target = $region9
    $region8: #{tpu_custom_call.1} parent=1 // pred_region
      %s29 = ssub.s32 2048, 2048
      %30 = vsyncadd [#allocation6], %s29
      %s31 = sshll.u32 [#allocation5], 4
      %s32 = int_to_ptr.vmem [resolvable:$true] %s31
      %37 = dma.hbm_to_vmem [thread:$0]  %s1, 2048, %s32, [#allocation6], 512, 512, 32
    $region9: #{tpu_custom_call.1} parent=1 // pred_fallthru
      _
    // Predicated region
    $region10: #{tpu_custom_call.1} parent=1 // pred_check
      _
    $region11: #{tpu_custom_call.1} parent=1 // pred_check_branch
      %39 = sbr.rel (0) target = $region13
    $region12: #{tpu_custom_call.1} parent=1 // pred_region
      %s41 = ssub.s32 64, 64
      %42 = vsyncadd [#allocation6], %s41
      %s44 = sshll.u32 [#allocation7], 4
      %s45 = int_to_ptr.vmem [resolvable:$true] %s44
      %47 = dma.hbm_to_vmem [thread:$0]  %s2, 64, %s45, [#allocation6]
    $region13: #{tpu_custom_call.1} parent=1 // pred_fallthru
      _
    // Predicated region
    $region14: #{tpu_custom_call.1} parent=1 // pred_check
      _
    $region15: #{tpu_custom_call.1} parent=1 // pred_check_branch
      %49 = sbr.rel (0) target = $region17
    $region16: #{tpu_custom_call.1} parent=1 // pred_region
      %s51 = ssub.s32 24576, 24576
      %52 = vsyncadd [#allocation9], %s51
      %s53 = sshll.u32 [#allocation8], 4
      %s54 = int_to_ptr.vmem [resolvable:$true] %s53
      %59 = dma.hbm_to_vmem [thread:$0]  %s3, 24576, %s54, [#allocation9], 384, 384, 24
    $region17: #{tpu_custom_call.1} parent=1 // pred_fallthru
      _
    // Predicated region
    $region18: #{tpu_custom_call.1} parent=1 // pred_check
      _
    $region19: #{tpu_custom_call.1} parent=1 // pred_check_branch
      %61 = sbr.rel (0) target = $region21
    $region20: #{tpu_custom_call.1} parent=1 // pred_region
      _
    $region21: #{tpu_custom_call.1} parent=1 // pred_fallthru
      _
    // Predicated region
    $region22: #{tpu_custom_call.1} parent=1 // pred_check
      _
    $region23: #{tpu_custom_call.1} parent=1 // pred_check_branch
      %63 = sbr.rel (0) target = $region25
    $region24: #{tpu_custom_call.1} parent=1 // pred_region
      %s65 = ssub.s32 6144, 6144
      %66 = vsyncadd [#allocation9], %s65
      %s67 = sshll.u32 [#allocation10], 4
      %s68 = int_to_ptr.vmem [resolvable:$true] %s67
      %73 = dma.hbm_to_vmem [thread:$0]  %s5, 6144, %s68, [#allocation9], 128, 128, 8
    $region25: #{tpu_custom_call.1} parent=1 // pred_fallthru
      _
    // Predicated region
    $region26: #{tpu_custom_call.1} parent=1 // pred_check
      _
    $region27: #{tpu_custom_call.1} parent=1 // pred_check_branch
      %75 = sbr.rel (0) target = $region29
    $region28: #{tpu_custom_call.1} parent=1 // pred_region
      _
    $region29: #{tpu_custom_call.1} parent=1 // pred_fallthru
      _
    // Predicated region
    $region30: #{tpu_custom_call.1} parent=1 // pred_check
      _
    $region31: #{tpu_custom_call.1} parent=1 // pred_check_branch
      %77 = sbr.rel (0) target = $region33
    $region32: #{tpu_custom_call.1} parent=1 // pred_region
      %78 = dma.done [#allocation3], 128
    $region33: #{tpu_custom_call.1} parent=1 // pred_fallthru
      _
    // Predicated region
    $region34: #{tpu_custom_call.1} parent=1 // pred_check
      _
    $region35: #{tpu_custom_call.1} parent=1 // pred_check_branch
      %80 = sbr.rel (0) target = $region37
    $region36: #{tpu_custom_call.1} parent=1 // pred_region
      %81 = dma.done [#allocation6], 2048
    $region37: #{tpu_custom_call.1} parent=1 // pred_fallthru
      _
    // Predicated region
    $region38: #{tpu_custom_call.1} parent=1 // pred_check
      _
    $region39: #{tpu_custom_call.1} parent=1 // pred_check_branch
      %83 = sbr.rel (0) target = $region41
    $region40: #{tpu_custom_call.1} parent=1 // pred_region
      %84 = dma.done [#allocation6], 64
    $region41: #{tpu_custom_call.1} parent=1 // pred_fallthru
      _
    // Predicated region
    $region42: #{tpu_custom_call.1} parent=1 // pred_check
      _
    $region43: #{tpu_custom_call.1} parent=1 // pred_check_branch
      %86 = sbr.rel (0) target = $region45
    $region44: #{tpu_custom_call.1} parent=1 // pred_region
      %87 = dma.done [#allocation9], 24576
    $region45: #{tpu_custom_call.1} parent=1 // pred_fallthru
      _
    // Predicated region
    $region46: #{tpu_custom_call.1} parent=1 // pred_check
      _
    $region47: #{tpu_custom_call.1} parent=1 // pred_check_branch
      %89 = sbr.rel (0) target = $region49
    $region48: #{tpu_custom_call.1} parent=1 // pred_region
      %90 = dma.done [#allocation9], 6144
    $region49: #{tpu_custom_call.1} parent=1 // pred_fallthru
      _
    %v91 = vld [vmem:[#allocation2] sm:$0xff]
    %v92 = vld [vmem:[#allocation5] sm:$0xff]
    %v93 = vld [vmem:[#allocation5 + $0x8] sm:$0xff]
    %v94 = vld [vmem:[#allocation5 + $0x10] sm:$0xff]
    %v95 = vld [vmem:[#allocation5 + $0x18] sm:$0xff]
    %v96 = vld [vmem:[#allocation5 + $0x20] sm:$0xff]
    %v97 = vld [vmem:[#allocation5 + $0x28] sm:$0xff]
    %v98 = vld [vmem:[#allocation5 + $0x30] sm:$0xff]
    %v99 = vld [vmem:[#allocation5 + $0x38] sm:$0xff]
    %v100 = vld [vmem:[#allocation5 + $0x40] sm:$0xff]
    %v101 = vld [vmem:[#allocation5 + $0x48] sm:$0xff]
    %v102 = vld [vmem:[#allocation5 + $0x50] sm:$0xff]
    %v103 = vld [vmem:[#allocation5 + $0x58] sm:$0xff]
    %v104 = vld [vmem:[#allocation5 + $0x60] sm:$0xff]
    %v105 = vld [vmem:[#allocation5 + $0x68] sm:$0xff]
    %v106 = vld [vmem:[#allocation5 + $0x70] sm:$0xff]
    %v107 = vld [vmem:[#allocation5 + $0x78] sm:$0xff]
    %v108 = vld [vmem:[#allocation7] sm:$0xf]
    %v110 = vlaneseq
    %v111 = vshrl.u32 %v110, 7
    %v112 = vsub.s32 0, %v111
    %v113 = vrot.slane %v108, %v112
    %v114 = vlaneseq
    %v115 = vshrl.u32 %v114, 7
    %v116 = vsub.s32 1, %v115
    %v117 = vrot.slane %v108, %v116
    %v118 = vlaneseq
    %v119 = vshrl.u32 %v118, 7
    %v120 = vsub.s32 2, %v119
    %v121 = vrot.slane %v108, %v120
    %v122 = vlaneseq
    %v123 = vshrl.u32 %v122, 7
    %v124 = vsub.s32 3, %v123
    %v125 = vrot.slane %v108, %v124
    %vm130 = vcmask 261120
    %v132 = vsel %vm130, %v91, 0
    %134 = vmatprep.subr.mxu0 0.0
    %135 = vmatpush1.msra.mxu0 0.0
    %136 = vmatprep.subr.mxu0 0.0
    %137 = vmatpush1.msra.mxu0 0.0
    %138 = vmatprep.subr.mxu0 0.0
    %139 = vmatpush1.msra.mxu0 0.0
    %140 = vmatprep.subr.mxu0 0.0
    %141 = vmatpush1.msra.mxu0 0.0
    %142 = vmatprep.subr.mxu0 0.0
    %143 = vmatpush1.msra.mxu0 0.0
    %144 = vmatprep.subr.mxu0 0.0
    %145 = vmatpush1.msra.mxu0 0.0
    %146 = vmatprep.subr.mxu0 0.0
    %147 = vmatpush1.msra.mxu0 0.0
    %148 = vmatprep.subr.mxu0 0.0
    %149 = vmatpush1.msra.mxu0 0.0
    %150 = vmatprep.subr.mxu0 0.0
    %151 = vmatpush1.msra.mxu0 0.0
    %152 = vmatprep.subr.mxu0 0.0
    %153 = vmatpush1.msra.mxu0 0.0
    %154 = vmatprep.subr.mxu0 0.0
    %155 = vmatpush1.msra.mxu0 0.0
    %156 = vmatprep.subr.mxu0 0.0
    %157 = vmatpush1.msra.mxu0 0.0
    %158 = vmatprep.subr.mxu0 %v105
    %159 = vmatpush1.msra.mxu0 %v104
    %160 = vmatprep.subr.mxu0 %v101
    %161 = vmatpush1.msra.mxu0 %v100
    %162 = vmatprep.subr.mxu0 %v97
    %163 = vmatpush1.msra.mxu0 %v96
    %164 = vmatprep.subr.mxu0 %v93
    %165 = vmatpush1.msra.mxu0 %v92
    %166 = vmatprep.subr.mxu0 0.0
    %167 = vmatpush2.msra.mxu0 0.0
    %168 = vmatprep.subr.mxu0 0.0
    %169 = vmatpush2.msra.mxu0 0.0
    %170 = vmatprep.subr.mxu0 0.0
    %171 = vmatpush2.msra.mxu0 0.0
    %172 = vmatprep.subr.mxu0 0.0
    %173 = vmatpush2.msra.mxu0 0.0
    %174 = vmatprep.subr.mxu0 0.0
    %175 = vmatpush2.msra.mxu0 0.0
    %176 = vmatprep.subr.mxu0 0.0
    %177 = vmatpush2.msra.mxu0 0.0
    %178 = vmatprep.subr.mxu0 0.0
    %179 = vmatpush2.msra.mxu0 0.0
    %180 = vmatprep.subr.mxu0 0.0
    %181 = vmatpush2.msra.mxu0 0.0
    %182 = vmatprep.subr.mxu0 0.0
    %183 = vmatpush2.msra.mxu0 0.0
    %184 = vmatprep.subr.mxu0 0.0
    %185 = vmatpush2.msra.mxu0 0.0
    %186 = vmatprep.subr.mxu0 0.0
    %187 = vmatpush2.msra.mxu0 0.0
    %188 = vmatprep.subr.mxu0 0.0
    %189 = vmatpush2.msra.mxu0 0.0
    %190 = vmatprep.subr.mxu0 0.0
    %191 = vmatpush2.msra.mxu0 0.0
    %192 = vmatprep.subr.mxu0 0.0
    %193 = vmatpush2.msra.mxu0 0.0
    %194 = vmatprep.subr.mxu0 0.0
    %195 = vmatpush2.msra.mxu0 0.0
    %196 = vmatprep.subr.mxu0 0.0
    %197 = vmatpush2.msra.mxu0 0.0
    %198 = vmatprep.mubr.f32.mxu0 0.0
    %199 = vmatmul.mubr.f32.gmra.mxu0 %v132
    %v200 = vpop.f32.mrf.mxu0
    %v201 = vadd.f32 %v113, %v200
    %v202 = vpop.f32.mrf.mxu0
    %v203 = vadd.f32 %v117, %v202
    %204 = vdwg.mxu0
    %205 = vmatprep.subr.mxu0 0.0
    %206 = vmatpush1.msra.mxu0 0.0
    %207 = vmatprep.subr.mxu0 0.0
    %208 = vmatpush1.msra.mxu0 0.0
    %209 = vmatprep.subr.mxu0 0.0
    %210 = vmatpush1.msra.mxu0 0.0
    %211 = vmatprep.subr.mxu0 0.0
    %212 = vmatpush1.msra.mxu0 0.0
    %213 = vmatprep.subr.mxu0 0.0
    %214 = vmatpush1.msra.mxu0 0.0
    %215 = vmatprep.subr.mxu0 0.0
    %216 = vmatpush1.msra.mxu0 0.0
    %217 = vmatprep.subr.mxu0 0.0
    %218 = vmatpush1.msra.mxu0 0.0
    %219 = vmatprep.subr.mxu0 0.0
    %220 = vmatpush1.msra.mxu0 0.0
    %221 = vmatprep.subr.mxu0 0.0
    %222 = vmatpush1.msra.mxu0 0.0
    %223 = vmatprep.subr.mxu0 0.0
    %224 = vmatpush1.msra.mxu0 0.0
    %225 = vmatprep.subr.mxu0 0.0
    %226 = vmatpush1.msra.mxu0 0.0
    %227 = vmatprep.subr.mxu0 0.0
    %228 = vmatpush1.msra.mxu0 0.0
    %229 = vmatprep.subr.mxu0 %v107
    %230 = vmatpush1.msra.mxu0 %v106
    %231 = vmatprep.subr.mxu0 %v103
    %232 = vmatpush1.msra.mxu0 %v102
    %233 = vmatprep.subr.mxu0 %v99
    %234 = vmatpush1.msra.mxu0 %v98
    %235 = vmatprep.subr.mxu0 %v95
    %236 = vmatpush1.msra.mxu0 %v94
    %237 = vmatprep.subr.mxu0 0.0
    %238 = vmatpush2.msra.mxu0 0.0
    %239 = vmatprep.subr.mxu0 0.0
    %240 = vmatpush2.msra.mxu0 0.0
    %241 = vmatprep.subr.mxu0 0.0
    %242 = vmatpush2.msra.mxu0 0.0
    %243 = vmatprep.subr.mxu0 0.0
    %244 = vmatpush2.msra.mxu0 0.0
    %245 = vmatprep.subr.mxu0 0.0
    %246 = vmatpush2.msra.mxu0 0.0
    %247 = vmatprep.subr.mxu0 0.0
    %248 = vmatpush2.msra.mxu0 0.0
    %249 = vmatprep.subr.mxu0 0.0
    %250 = vmatpush2.msra.mxu0 0.0
    %251 = vmatprep.subr.mxu0 0.0
    %252 = vmatpush2.msra.mxu0 0.0
    %253 = vmatprep.subr.mxu0 0.0
    %254 = vmatpush2.msra.mxu0 0.0
    %255 = vmatprep.subr.mxu0 0.0
    %256 = vmatpush2.msra.mxu0 0.0
    %257 = vmatprep.subr.mxu0 0.0
    %258 = vmatpush2.msra.mxu0 0.0
    %259 = vmatprep.subr.mxu0 0.0
    %260 = vmatpush2.msra.mxu0 0.0
    %261 = vmatprep.subr.mxu0 0.0
    %262 = vmatpush2.msra.mxu0 0.0
    %263 = vmatprep.subr.mxu0 0.0
    %264 = vmatpush2.msra.mxu0 0.0
    %265 = vmatprep.subr.mxu0 0.0
    %266 = vmatpush2.msra.mxu0 0.0
    %267 = vmatprep.subr.mxu0 0.0
    %268 = vmatpush2.msra.mxu0 0.0
    %269 = vmatprep.mubr.f32.mxu0 0.0
    %270 = vmatmul.mubr.f32.gmra.mxu0 %v132
    %v271 = vpop.f32.mrf.mxu0
    %v272 = vadd.f32 %v121, %v271
    %v273 = vpop.f32.mrf.mxu0
    %v274 = vadd.f32 %v125, %v273
    %275 = vdwg.mxu0
    %v276 = vmax.f32 %v201, 0.0
    %v277 = vmax.f32 %v203, 0.0
    %v278 = vmax.f32 %v272, 0.0
    %v279 = vmax.f32 %v274, 0.0
    %v280 = vld [vmem:[#allocation8] sm:$0xff]
    %v281 = vld [vmem:[#allocation8 + $0x8] sm:$0xff]
    %v282 = vld [vmem:[#allocation8 + $0x10] sm:$0xff]
    %v283 = vld [vmem:[#allocation8 + $0x18] sm:$0xff]
    %v284 = vld [vmem:[#allocation8 + $0x20] sm:$0xff]
    %v285 = vld [vmem:[#allocation8 + $0x28] sm:$0xff]
    %v286 = vld [vmem:[#allocation8 + $0x30] sm:$0xff]
    %v287 = vld [vmem:[#allocation8 + $0x38] sm:$0xff]
    %v288 = vld [vmem:[#allocation8 + $0x40] sm:$0xff]
    %v289 = vld [vmem:[#allocation8 + $0x48] sm:$0xff]
    %v290 = vld [vmem:[#allocation8 + $0x50] sm:$0xff]
    %v291 = vld [vmem:[#allocation8 + $0x58] sm:$0xff]
    %v292 = vld [vmem:[#allocation8 + $0x60] sm:$0xff]
    %v293 = vld [vmem:[#allocation8 + $0x68] sm:$0xff]
    %v294 = vld [vmem:[#allocation8 + $0x70] sm:$0xff]
    %v295 = vld [vmem:[#allocation8 + $0x78] sm:$0xff]
    %v296 = vld [vmem:[#allocation8 + $0x80] sm:$0xff]
    %v297 = vld [vmem:[#allocation8 + $0x88] sm:$0xff]
    %v298 = vld [vmem:[#allocation8 + $0x90] sm:$0xff]
    %v299 = vld [vmem:[#allocation8 + $0x98] sm:$0xff]
    %v300 = vld [vmem:[#allocation8 + $0xa0] sm:$0xff]
    %v301 = vld [vmem:[#allocation8 + $0xa8] sm:$0xff]
    %v302 = vld [vmem:[#allocation8 + $0xb0] sm:$0xff]
    %v303 = vld [vmem:[#allocation8 + $0xb8] sm:$0xff]
    %v304 = vld [vmem:[#allocation8 + $0xc0] sm:$0xff]
    %v305 = vld [vmem:[#allocation8 + $0xc8] sm:$0xff]
    %v306 = vld [vmem:[#allocation8 + $0xd0] sm:$0xff]
    %v307 = vld [vmem:[#allocation8 + $0xd8] sm:$0xff]
    %v308 = vld [vmem:[#allocation8 + $0xe0] sm:$0xff]
    %v309 = vld [vmem:[#allocation8 + $0xe8] sm:$0xff]
    %v310 = vld [vmem:[#allocation8 + $0xf0] sm:$0xff]
    %v311 = vld [vmem:[#allocation8 + $0xf8] sm:$0xff]
    %v312 = vld [vmem:[#allocation8 + $0x100] sm:$0xff]
    %v313 = vld [vmem:[#allocation8 + $0x108] sm:$0xff]
    %v314 = vld [vmem:[#allocation8 + $0x110] sm:$0xff]
    %v315 = vld [vmem:[#allocation8 + $0x118] sm:$0xff]
    %v316 = vld [vmem:[#allocation8 + $0x120] sm:$0xff]
    %v317 = vld [vmem:[#allocation8 + $0x128] sm:$0xff]
    %v318 = vld [vmem:[#allocation8 + $0x130] sm:$0xff]
    %v319 = vld [vmem:[#allocation8 + $0x138] sm:$0xff]
    %v320 = vld [vmem:[#allocation8 + $0x140] sm:$0xff]
    %v321 = vld [vmem:[#allocation8 + $0x148] sm:$0xff]
    %v322 = vld [vmem:[#allocation8 + $0x150] sm:$0xff]
    %v323 = vld [vmem:[#allocation8 + $0x158] sm:$0xff]
    %v324 = vld [vmem:[#allocation8 + $0x160] sm:$0xff]
    %v325 = vld [vmem:[#allocation8 + $0x168] sm:$0xff]
    %v326 = vld [vmem:[#allocation8 + $0x170] sm:$0xff]
    %v327 = vld [vmem:[#allocation8 + $0x178] sm:$0xff]
    %v328 = vld [vmem:[#allocation8 + $0x180] sm:$0xff]
    %v329 = vld [vmem:[#allocation8 + $0x188] sm:$0xff]
    %v330 = vld [vmem:[#allocation8 + $0x190] sm:$0xff]
    %v331 = vld [vmem:[#allocation8 + $0x198] sm:$0xff]
    %v332 = vld [vmem:[#allocation8 + $0x1a0] sm:$0xff]
    %v333 = vld [vmem:[#allocation8 + $0x1a8] sm:$0xff]
    %v334 = vld [vmem:[#allocation8 + $0x1b0] sm:$0xff]
    %v335 = vld [vmem:[#allocation8 + $0x1b8] sm:$0xff]
    %v336 = vld [vmem:[#allocation8 + $0x1c0] sm:$0xff]
    %v337 = vld [vmem:[#allocation8 + $0x1c8] sm:$0xff]
    %v338 = vld [vmem:[#allocation8 + $0x1d0] sm:$0xff]
    %v339 = vld [vmem:[#allocation8 + $0x1d8] sm:$0xff]
    %v340 = vld [vmem:[#allocation8 + $0x1e0] sm:$0xff]
    %v341 = vld [vmem:[#allocation8 + $0x1e8] sm:$0xff]
    %v342 = vld [vmem:[#allocation8 + $0x1f0] sm:$0xff]
    %v343 = vld [vmem:[#allocation8 + $0x1f8] sm:$0xff]
    %v344 = vld [vmem:[#allocation8 + $0x200] sm:$0xff]
    %v345 = vld [vmem:[#allocation8 + $0x208] sm:$0xff]
    %v346 = vld [vmem:[#allocation8 + $0x210] sm:$0xff]
    %v347 = vld [vmem:[#allocation8 + $0x218] sm:$0xff]
    %v348 = vld [vmem:[#allocation8 + $0x220] sm:$0xff]
    %v349 = vld [vmem:[#allocation8 + $0x228] sm:$0xff]
    %v350 = vld [vmem:[#allocation8 + $0x230] sm:$0xff]
    %v351 = vld [vmem:[#allocation8 + $0x238] sm:$0xff]
    %v352 = vld [vmem:[#allocation8 + $0x240] sm:$0xff]
    %v353 = vld [vmem:[#allocation8 + $0x248] sm:$0xff]
    %v354 = vld [vmem:[#allocation8 + $0x250] sm:$0xff]
    %v355 = vld [vmem:[#allocation8 + $0x258] sm:$0xff]
    %v356 = vld [vmem:[#allocation8 + $0x260] sm:$0xff]
    %v357 = vld [vmem:[#allocation8 + $0x268] sm:$0xff]
    %v358 = vld [vmem:[#allocation8 + $0x270] sm:$0xff]
    %v359 = vld [vmem:[#allocation8 + $0x278] sm:$0xff]
    %v360 = vld [vmem:[#allocation8 + $0x280] sm:$0xff]
    %v361 = vld [vmem:[#allocation8 + $0x288] sm:$0xff]
    %v362 = vld [vmem:[#allocation8 + $0x290] sm:$0xff]
    %v363 = vld [vmem:[#allocation8 + $0x298] sm:$0xff]
    %v364 = vld [vmem:[#allocation8 + $0x2a0] sm:$0xff]
    %v365 = vld [vmem:[#allocation8 + $0x2a8] sm:$0xff]
    %v366 = vld [vmem:[#allocation8 + $0x2b0] sm:$0xff]
    %v367 = vld [vmem:[#allocation8 + $0x2b8] sm:$0xff]
    %v368 = vld [vmem:[#allocation8 + $0x2c0] sm:$0xff]
    %v369 = vld [vmem:[#allocation8 + $0x2c8] sm:$0xff]
    %v370 = vld [vmem:[#allocation8 + $0x2d0] sm:$0xff]
    %v371 = vld [vmem:[#allocation8 + $0x2d8] sm:$0xff]
    %v372 = vld [vmem:[#allocation8 + $0x2e0] sm:$0xff]
    %v373 = vld [vmem:[#allocation8 + $0x2e8] sm:$0xff]
    %v374 = vld [vmem:[#allocation8 + $0x2f0] sm:$0xff]
    %v375 = vld [vmem:[#allocation8 + $0x2f8] sm:$0xff]
    %v376 = vld [vmem:[#allocation8 + $0x300] sm:$0xff]
    %v377 = vld [vmem:[#allocation8 + $0x308] sm:$0xff]
    %v378 = vld [vmem:[#allocation8 + $0x310] sm:$0xff]
    %v379 = vld [vmem:[#allocation8 + $0x318] sm:$0xff]
    %v380 = vld [vmem:[#allocation8 + $0x320] sm:$0xff]
    %v381 = vld [vmem:[#allocation8 + $0x328] sm:$0xff]
    %v382 = vld [vmem:[#allocation8 + $0x330] sm:$0xff]
    %v383 = vld [vmem:[#allocation8 + $0x338] sm:$0xff]
    %v384 = vld [vmem:[#allocation8 + $0x340] sm:$0xff]
    %v385 = vld [vmem:[#allocation8 + $0x348] sm:$0xff]
    %v386 = vld [vmem:[#allocation8 + $0x350] sm:$0xff]
    %v387 = vld [vmem:[#allocation8 + $0x358] sm:$0xff]
    %v388 = vld [vmem:[#allocation8 + $0x360] sm:$0xff]
    %v389 = vld [vmem:[#allocation8 + $0x368] sm:$0xff]
    %v390 = vld [vmem:[#allocation8 + $0x370] sm:$0xff]
    %v391 = vld [vmem:[#allocation8 + $0x378] sm:$0xff]
    %v392 = vld [vmem:[#allocation8 + $0x380] sm:$0xff]
    %v393 = vld [vmem:[#allocation8 + $0x388] sm:$0xff]
    %v394 = vld [vmem:[#allocation8 + $0x390] sm:$0xff]
    %v395 = vld [vmem:[#allocation8 + $0x398] sm:$0xff]
    %v396 = vld [vmem:[#allocation8 + $0x3a0] sm:$0xff]
    %v397 = vld [vmem:[#allocation8 + $0x3a8] sm:$0xff]
    %v398 = vld [vmem:[#allocation8 + $0x3b0] sm:$0xff]
    %v399 = vld [vmem:[#allocation8 + $0x3b8] sm:$0xff]
    %v400 = vld [vmem:[#allocation8 + $0x3c0] sm:$0xff]
    %v401 = vld [vmem:[#allocation8 + $0x3c8] sm:$0xff]
    %v402 = vld [vmem:[#allocation8 + $0x3d0] sm:$0xff]
    %v403 = vld [vmem:[#allocation8 + $0x3d8] sm:$0xff]
    %v404 = vld [vmem:[#allocation8 + $0x3e0] sm:$0xff]
    %v405 = vld [vmem:[#allocation8 + $0x3e8] sm:$0xff]
    %v406 = vld [vmem:[#allocation8 + $0x3f0] sm:$0xff]
    %v407 = vld [vmem:[#allocation8 + $0x3f8] sm:$0xff]
    %v408 = vld [vmem:[#allocation8 + $0x400] sm:$0xff]
    %v409 = vld [vmem:[#allocation8 + $0x408] sm:$0xff]
    %v410 = vld [vmem:[#allocation8 + $0x410] sm:$0xff]
    %v411 = vld [vmem:[#allocation8 + $0x418] sm:$0xff]
    %v412 = vld [vmem:[#allocation8 + $0x420] sm:$0xff]
    %v413 = vld [vmem:[#allocation8 + $0x428] sm:$0xff]
    %v414 = vld [vmem:[#allocation8 + $0x430] sm:$0xff]
    %v415 = vld [vmem:[#allocation8 + $0x438] sm:$0xff]
    %v416 = vld [vmem:[#allocation8 + $0x440] sm:$0xff]
    %v417 = vld [vmem:[#allocation8 + $0x448] sm:$0xff]
    %v418 = vld [vmem:[#allocation8 + $0x450] sm:$0xff]
    %v419 = vld [vmem:[#allocation8 + $0x458] sm:$0xff]
    %v420 = vld [vmem:[#allocation8 + $0x460] sm:$0xff]
    %v421 = vld [vmem:[#allocation8 + $0x468] sm:$0xff]
    %v422 = vld [vmem:[#allocation8 + $0x470] sm:$0xff]
    %v423 = vld [vmem:[#allocation8 + $0x478] sm:$0xff]
    %v424 = vld [vmem:[#allocation8 + $0x480] sm:$0xff]
    %v425 = vld [vmem:[#allocation8 + $0x488] sm:$0xff]
    %v426 = vld [vmem:[#allocation8 + $0x490] sm:$0xff]
    %v427 = vld [vmem:[#allocation8 + $0x498] sm:$0xff]
    %v428 = vld [vmem:[#allocation8 + $0x4a0] sm:$0xff]
    %v429 = vld [vmem:[#allocation8 + $0x4a8] sm:$0xff]
    %v430 = vld [vmem:[#allocation8 + $0x4b0] sm:$0xff]
    %v431 = vld [vmem:[#allocation8 + $0x4b8] sm:$0xff]
    %v432 = vld [vmem:[#allocation8 + $0x4c0] sm:$0xff]
    %v433 = vld [vmem:[#allocation8 + $0x4c8] sm:$0xff]
    %v434 = vld [vmem:[#allocation8 + $0x4d0] sm:$0xff]
    %v435 = vld [vmem:[#allocation8 + $0x4d8] sm:$0xff]
    %v436 = vld [vmem:[#allocation8 + $0x4e0] sm:$0xff]
    %v437 = vld [vmem:[#allocation8 + $0x4e8] sm:$0xff]
    %v438 = vld [vmem:[#allocation8 + $0x4f0] sm:$0xff]
    %v439 = vld [vmem:[#allocation8 + $0x4f8] sm:$0xff]
    %v440 = vld [vmem:[#allocation8 + $0x500] sm:$0xff]
    %v441 = vld [vmem:[#allocation8 + $0x508] sm:$0xff]
    %v442 = vld [vmem:[#allocation8 + $0x510] sm:$0xff]
    %v443 = vld [vmem:[#allocation8 + $0x518] sm:$0xff]
    %v444 = vld [vmem:[#allocation8 + $0x520] sm:$0xff]
    %v445 = vld [vmem:[#allocation8 + $0x528] sm:$0xff]
    %v446 = vld [vmem:[#allocation8 + $0x530] sm:$0xff]
    %v447 = vld [vmem:[#allocation8 + $0x538] sm:$0xff]
    %v448 = vld [vmem:[#allocation8 + $0x540] sm:$0xff]
    %v449 = vld [vmem:[#allocation8 + $0x548] sm:$0xff]
    %v450 = vld [vmem:[#allocation8 + $0x550] sm:$0xff]
    %v451 = vld [vmem:[#allocation8 + $0x558] sm:$0xff]
    %v452 = vld [vmem:[#allocation8 + $0x560] sm:$0xff]
    %v453 = vld [vmem:[#allocation8 + $0x568] sm:$0xff]
    %v454 = vld [vmem:[#allocation8 + $0x570] sm:$0xff]
    %v455 = vld [vmem:[#allocation8 + $0x578] sm:$0xff]
    %v456 = vld [vmem:[#allocation8 + $0x580] sm:$0xff]
    %v457 = vld [vmem:[#allocation8 + $0x588] sm:$0xff]
    %v458 = vld [vmem:[#allocation8 + $0x590] sm:$0xff]
    %v459 = vld [vmem:[#allocation8 + $0x598] sm:$0xff]
    %v460 = vld [vmem:[#allocation8 + $0x5a0] sm:$0xff]
    %v461 = vld [vmem:[#allocation8 + $0x5a8] sm:$0xff]
    %v462 = vld [vmem:[#allocation8 + $0x5b0] sm:$0xff]
    %v463 = vld [vmem:[#allocation8 + $0x5b8] sm:$0xff]
    %v464 = vld [vmem:[#allocation8 + $0x5c0] sm:$0xff]
    %v465 = vld [vmem:[#allocation8 + $0x5c8] sm:$0xff]
    %v466 = vld [vmem:[#allocation8 + $0x5d0] sm:$0xff]
    %v467 = vld [vmem:[#allocation8 + $0x5d8] sm:$0xff]
    %v468 = vld [vmem:[#allocation8 + $0x5e0] sm:$0xff]
    %v469 = vld [vmem:[#allocation8 + $0x5e8] sm:$0xff]
    %v470 = vld [vmem:[#allocation8 + $0x5f0] sm:$0xff]
    %v471 = vld [vmem:[#allocation8 + $0x5f8] sm:$0xff]
    %v472 = vld [vmem:[%s4] sm:$0x7]
    %v474 = vlaneseq
    %v475 = vshrl.u32 %v474, 7
    %v476 = vsub.s32 0, %v475
    %v477 = vrot.slane %v472, %v476
    %v478 = vlaneseq
    %v479 = vshrl.u32 %v478, 7
    %v480 = vsub.s32 1, %v479
    %v481 = vrot.slane %v472, %v480
    %v482 = vlaneseq
    %v483 = vshrl.u32 %v482, 7
    %v484 = vsub.s32 2, %v483
    %v485 = vrot.slane %v472, %v484
    %489 = vmatprep.subr.mxu0 %v326
    %490 = vmatpush1.msra.mxu0 %v325
    %491 = vmatprep.subr.mxu0 %v323
    %492 = vmatpush1.msra.mxu0 %v322
    %493 = vmatprep.subr.mxu0 %v320
    %494 = vmatpush1.msra.mxu0 %v319
    %495 = vmatprep.subr.mxu0 %v317
    %496 = vmatpush1.msra.mxu0 %v316
    %497 = vmatprep.subr.mxu0 %v314
    %498 = vmatpush1.msra.mxu0 %v313
    %499 = vmatprep.subr.mxu0 %v311
    %500 = vmatpush1.msra.mxu0 %v310
    %501 = vmatprep.subr.mxu0 %v308
    %502 = vmatpush1.msra.mxu0 %v307
    %503 = vmatprep.subr.mxu0 %v305
    %504 = vmatpush1.msra.mxu0 %v304
    %505 = vmatprep.subr.mxu0 %v302
    %506 = vmatpush1.msra.mxu0 %v301
    %507 = vmatprep.subr.mxu0 %v299
    %508 = vmatpush1.msra.mxu0 %v298
    %509 = vmatprep.subr.mxu0 %v296
    %510 = vmatpush1.msra.mxu0 %v295
    %511 = vmatprep.subr.mxu0 %v293
    %512 = vmatpush1.msra.mxu0 %v292
    %513 = vmatprep.subr.mxu0 %v290
    %514 = vmatpush1.msra.mxu0 %v289
    %515 = vmatprep.subr.mxu0 %v287
    %516 = vmatpush1.msra.mxu0 %v286
    %517 = vmatprep.subr.mxu0 %v284
    %518 = vmatpush1.msra.mxu0 %v283
    %519 = vmatprep.subr.mxu0 %v281
    %520 = vmatpush1.msra.mxu0 %v280
    %521 = vmatprep.subr.mxu0 %v374
    %522 = vmatpush2.msra.mxu0 %v373
    %523 = vmatprep.subr.mxu0 %v371
    %524 = vmatpush2.msra.mxu0 %v370
    %525 = vmatprep.subr.mxu0 %v368
    %526 = vmatpush2.msra.mxu0 %v367
    %527 = vmatprep.subr.mxu0 %v365
    %528 = vmatpush2.msra.mxu0 %v364
    %529 = vmatprep.subr.mxu0 %v362
    %530 = vmatpush2.msra.mxu0 %v361
    %531 = vmatprep.subr.mxu0 %v359
    %532 = vmatpush2.msra.mxu0 %v358
    %533 = vmatprep.subr.mxu0 %v356
    %534 = vmatpush2.msra.mxu0 %v355
    %535 = vmatprep.subr.mxu0 %v353
    %536 = vmatpush2.msra.mxu0 %v352
    %537 = vmatprep.subr.mxu0 %v350
    %538 = vmatpush2.msra.mxu0 %v349
    %539 = vmatprep.subr.mxu0 %v347
    %540 = vmatpush2.msra.mxu0 %v346
    %541 = vmatprep.subr.mxu0 %v344
    %542 = vmatpush2.msra.mxu0 %v343
    %543 = vmatprep.subr.mxu0 %v341
    %544 = vmatpush2.msra.mxu0 %v340
    %545 = vmatprep.subr.mxu0 %v338
    %546 = vmatpush2.msra.mxu0 %v337
    %547 = vmatprep.subr.mxu0 %v335
    %548 = vmatpush2.msra.mxu0 %v334
    %549 = vmatprep.subr.mxu0 %v332
    %550 = vmatpush2.msra.mxu0 %v331
    %551 = vmatprep.subr.mxu0 %v329
    %552 = vmatpush2.msra.mxu0 %v328
    %553 = vmatprep.mubr.f32.mxu0 %v277
    %554 = vmatmul.mubr.f32.gmra.mxu0 %v276
    %v555 = vpop.f32.mrf.mxu0
    %v556 = vadd.f32 %v477, %v555
    %v557 = vpop.f32.mrf.mxu0
    %v558 = vadd.f32 %v481, %v557
    %559 = vdwg.mxu0
    %560 = vmatprep.subr.mxu0 %v422
    %561 = vmatpush1.msra.mxu0 %v421
    %562 = vmatprep.subr.mxu0 %v419
    %563 = vmatpush1.msra.mxu0 %v418
    %564 = vmatprep.subr.mxu0 %v416
    %565 = vmatpush1.msra.mxu0 %v415
    %566 = vmatprep.subr.mxu0 %v413
    %567 = vmatpush1.msra.mxu0 %v412
    %568 = vmatprep.subr.mxu0 %v410
    %569 = vmatpush1.msra.mxu0 %v409
    %570 = vmatprep.subr.mxu0 %v407
    %571 = vmatpush1.msra.mxu0 %v406
    %572 = vmatprep.subr.mxu0 %v404
    %573 = vmatpush1.msra.mxu0 %v403
    %574 = vmatprep.subr.mxu0 %v401
    %575 = vmatpush1.msra.mxu0 %v400
    %576 = vmatprep.subr.mxu0 %v398
    %577 = vmatpush1.msra.mxu0 %v397
    %578 = vmatprep.subr.mxu0 %v395
    %579 = vmatpush1.msra.mxu0 %v394
    %580 = vmatprep.subr.mxu0 %v392
    %581 = vmatpush1.msra.mxu0 %v391
    %582 = vmatprep.subr.mxu0 %v389
    %583 = vmatpush1.msra.mxu0 %v388
    %584 = vmatprep.subr.mxu0 %v386
    %585 = vmatpush1.msra.mxu0 %v385
    %586 = vmatprep.subr.mxu0 %v383
    %587 = vmatpush1.msra.mxu0 %v382
    %588 = vmatprep.subr.mxu0 %v380
    %589 = vmatpush1.msra.mxu0 %v379
    %590 = vmatprep.subr.mxu0 %v377
    %591 = vmatpush1.msra.mxu0 %v376
    %592 = vmatprep.subr.mxu0 %v470
    %593 = vmatpush2.msra.mxu0 %v469
    %594 = vmatprep.subr.mxu0 %v467
    %595 = vmatpush2.msra.mxu0 %v466
    %596 = vmatprep.subr.mxu0 %v464
    %597 = vmatpush2.msra.mxu0 %v463
    %598 = vmatprep.subr.mxu0 %v461
    %599 = vmatpush2.msra.mxu0 %v460
    %600 = vmatprep.subr.mxu0 %v458
    %601 = vmatpush2.msra.mxu0 %v457
    %602 = vmatprep.subr.mxu0 %v455
    %603 = vmatpush2.msra.mxu0 %v454
    %604 = vmatprep.subr.mxu0 %v452
    %605 = vmatpush2.msra.mxu0 %v451
    %606 = vmatprep.subr.mxu0 %v449
    %607 = vmatpush2.msra.mxu0 %v448
    %608 = vmatprep.subr.mxu0 %v446
    %609 = vmatpush2.msra.mxu0 %v445
    %610 = vmatprep.subr.mxu0 %v443
    %611 = vmatpush2.msra.mxu0 %v442
    %612 = vmatprep.subr.mxu0 %v440
    %613 = vmatpush2.msra.mxu0 %v439
    %614 = vmatprep.subr.mxu0 %v437
    %615 = vmatpush2.msra.mxu0 %v436
    %616 = vmatprep.subr.mxu0 %v434
    %617 = vmatpush2.msra.mxu0 %v433
    %618 = vmatprep.subr.mxu0 %v431
    %619 = vmatpush2.msra.mxu0 %v430
    %620 = vmatprep.subr.mxu0 %v428
    %621 = vmatpush2.msra.mxu0 %v427
    %622 = vmatprep.subr.mxu0 %v425
    %623 = vmatpush2.msra.mxu0 %v424
    %624 = vmatprep.mubr.f32.mxu0 %v279
    %625 = vmatmul.mubr.f32.gmra.mxu0 %v278
    %v626 = vpop.f32.mrf.mxu0
    %v627 = vadd.f32 %v556, %v626
    %v628 = vpop.f32.mrf.mxu0
    %v629 = vadd.f32 %v558, %v628
    %630 = vdwg.mxu0
    %631 = vmatprep.subr.mxu0 0.0
    %632 = vmatpush1.msra.mxu0 %v327
    %633 = vmatprep.subr.mxu0 0.0
    %634 = vmatpush1.msra.mxu0 %v324
    %635 = vmatprep.subr.mxu0 0.0
    %636 = vmatpush1.msra.mxu0 %v321
    %637 = vmatprep.subr.mxu0 0.0
    %638 = vmatpush1.msra.mxu0 %v318
    %639 = vmatprep.subr.mxu0 0.0
    %640 = vmatpush1.msra.mxu0 %v315
    %641 = vmatprep.subr.mxu0 0.0
    %642 = vmatpush1.msra.mxu0 %v312
    %643 = vmatprep.subr.mxu0 0.0
    %644 = vmatpush1.msra.mxu0 %v309
    %645 = vmatprep.subr.mxu0 0.0
    %646 = vmatpush1.msra.mxu0 %v306
    %647 = vmatprep.subr.mxu0 0.0
    %648 = vmatpush1.msra.mxu0 %v303
    %649 = vmatprep.subr.mxu0 0.0
    %650 = vmatpush1.msra.mxu0 %v300
    %651 = vmatprep.subr.mxu0 0.0
    %652 = vmatpush1.msra.mxu0 %v297
    %653 = vmatprep.subr.mxu0 0.0
    %654 = vmatpush1.msra.mxu0 %v294
    %655 = vmatprep.subr.mxu0 0.0
    %656 = vmatpush1.msra.mxu0 %v291
    %657 = vmatprep.subr.mxu0 0.0
    %658 = vmatpush1.msra.mxu0 %v288
    %659 = vmatprep.subr.mxu0 0.0
    %660 = vmatpush1.msra.mxu0 %v285
    %661 = vmatprep.subr.mxu0 0.0
    %662 = vmatpush1.msra.mxu0 %v282
    %663 = vmatprep.subr.mxu0 0.0
    %664 = vmatpush2.msra.mxu0 %v375
    %665 = vmatprep.subr.mxu0 0.0
    %666 = vmatpush2.msra.mxu0 %v372
    %667 = vmatprep.subr.mxu0 0.0
    %668 = vmatpush2.msra.mxu0 %v369
    %669 = vmatprep.subr.mxu0 0.0
    %670 = vmatpush2.msra.mxu0 %v366
    %671 = vmatprep.subr.mxu0 0.0
    %672 = vmatpush2.msra.mxu0 %v363
    %673 = vmatprep.subr.mxu0 0.0
    %674 = vmatpush2.msra.mxu0 %v360
    %675 = vmatprep.subr.mxu0 0.0
    %676 = vmatpush2.msra.mxu0 %v357
    %677 = vmatprep.subr.mxu0 0.0
    %678 = vmatpush2.msra.mxu0 %v354
    %679 = vmatprep.subr.mxu0 0.0
    %680 = vmatpush2.msra.mxu0 %v351
    %681 = vmatprep.subr.mxu0 0.0
    %682 = vmatpush2.msra.mxu0 %v348
    %683 = vmatprep.subr.mxu0 0.0
    %684 = vmatpush2.msra.mxu0 %v345
    %685 = vmatprep.subr.mxu0 0.0
    %686 = vmatpush2.msra.mxu0 %v342
    %687 = vmatprep.subr.mxu0 0.0
    %688 = vmatpush2.msra.mxu0 %v339
    %689 = vmatprep.subr.mxu0 0.0
    %690 = vmatpush2.msra.mxu0 %v336
    %691 = vmatprep.subr.mxu0 0.0
    %692 = vmatpush2.msra.mxu0 %v333
    %693 = vmatprep.subr.mxu0 0.0
    %694 = vmatpush2.msra.mxu0 %v330
    %695 = vmatprep.mubr.f32.mxu0 %v277
    %696 = vmatmul.mubr.f32.gmra.mxu0 %v276
    %v697 = vpop.f32.mrf.mxu0
    %v698 = vadd.f32 %v485, %v697
    %v699 = vpop.f32.mrf.mxu0
    %700 = vdwg.mxu0
    %701 = vmatprep.subr.mxu0 0.0
    %702 = vmatpush1.msra.mxu0 %v423
    %703 = vmatprep.subr.mxu0 0.0
    %704 = vmatpush1.msra.mxu0 %v420
    %705 = vmatprep.subr.mxu0 0.0
    %706 = vmatpush1.msra.mxu0 %v417
    %707 = vmatprep.subr.mxu0 0.0
    %708 = vmatpush1.msra.mxu0 %v414
    %709 = vmatprep.subr.mxu0 0.0
    %710 = vmatpush1.msra.mxu0 %v411
    %711 = vmatprep.subr.mxu0 0.0
    %712 = vmatpush1.msra.mxu0 %v408
    %713 = vmatprep.subr.mxu0 0.0
    %714 = vmatpush1.msra.mxu0 %v405
    %715 = vmatprep.subr.mxu0 0.0
    %716 = vmatpush1.msra.mxu0 %v402
    %717 = vmatprep.subr.mxu0 0.0
    %718 = vmatpush1.msra.mxu0 %v399
    %719 = vmatprep.subr.mxu0 0.0
    %720 = vmatpush1.msra.mxu0 %v396
    %721 = vmatprep.subr.mxu0 0.0
    %722 = vmatpush1.msra.mxu0 %v393
    %723 = vmatprep.subr.mxu0 0.0
    %724 = vmatpush1.msra.mxu0 %v390
    %725 = vmatprep.subr.mxu0 0.0
    %726 = vmatpush1.msra.mxu0 %v387
    %727 = vmatprep.subr.mxu0 0.0
    %728 = vmatpush1.msra.mxu0 %v384
    %729 = vmatprep.subr.mxu0 0.0
    %730 = vmatpush1.msra.mxu0 %v381
    %731 = vmatprep.subr.mxu0 0.0
    %732 = vmatpush1.msra.mxu0 %v378
    %733 = vmatprep.subr.mxu0 0.0
    %734 = vmatpush2.msra.mxu0 %v471
    %735 = vmatprep.subr.mxu0 0.0
    %736 = vmatpush2.msra.mxu0 %v468
    %737 = vmatprep.subr.mxu0 0.0
    %738 = vmatpush2.msra.mxu0 %v465
    %739 = vmatprep.subr.mxu0 0.0
    %740 = vmatpush2.msra.mxu0 %v462
    %741 = vmatprep.subr.mxu0 0.0
    %742 = vmatpush2.msra.mxu0 %v459
    %743 = vmatprep.subr.mxu0 0.0
    %744 = vmatpush2.msra.mxu0 %v456
    %745 = vmatprep.subr.mxu0 0.0
    %746 = vmatpush2.msra.mxu0 %v453
    %747 = vmatprep.subr.mxu0 0.0
    %748 = vmatpush2.msra.mxu0 %v450
    %749 = vmatprep.subr.mxu0 0.0
    %750 = vmatpush2.msra.mxu0 %v447
    %751 = vmatprep.subr.mxu0 0.0
    %752 = vmatpush2.msra.mxu0 %v444
    %753 = vmatprep.subr.mxu0 0.0
    %754 = vmatpush2.msra.mxu0 %v441
    %755 = vmatprep.subr.mxu0 0.0
    %756 = vmatpush2.msra.mxu0 %v438
    %757 = vmatprep.subr.mxu0 0.0
    %758 = vmatpush2.msra.mxu0 %v435
    %759 = vmatprep.subr.mxu0 0.0
    %760 = vmatpush2.msra.mxu0 %v432
    %761 = vmatprep.subr.mxu0 0.0
    %762 = vmatpush2.msra.mxu0 %v429
    %763 = vmatprep.subr.mxu0 0.0
    %764 = vmatpush2.msra.mxu0 %v426
    %765 = vmatprep.mubr.f32.mxu0 %v279
    %766 = vmatmul.mubr.f32.gmra.mxu0 %v278
    %v767 = vpop.f32.mrf.mxu0
    %v768 = vadd.f32 %v698, %v767
    %v769 = vpop.f32.mrf.mxu0
    %770 = vdwg.mxu0
    %v771 = vmax.f32 %v627, 0.0
    %v772 = vmax.f32 %v629, 0.0
    %v773 = vmax.f32 %v768, 0.0
    %v774 = vld [vmem:[#allocation10] sm:$0xff]
    %v775 = vld [vmem:[#allocation10 + $0x8] sm:$0xff]
    %v776 = vld [vmem:[#allocation10 + $0x10] sm:$0xff]
    %v777 = vld [vmem:[#allocation10 + $0x18] sm:$0xff]
    %v778 = vld [vmem:[#allocation10 + $0x20] sm:$0xff]
    %v779 = vld [vmem:[#allocation10 + $0x28] sm:$0xff]
    %v780 = vld [vmem:[#allocation10 + $0x30] sm:$0xff]
    %v781 = vld [vmem:[#allocation10 + $0x38] sm:$0xff]
    %v782 = vld [vmem:[#allocation10 + $0x40] sm:$0xff]
    %v783 = vld [vmem:[#allocation10 + $0x48] sm:$0xff]
    %v784 = vld [vmem:[#allocation10 + $0x50] sm:$0xff]
    %v785 = vld [vmem:[#allocation10 + $0x58] sm:$0xff]
    %v786 = vld [vmem:[#allocation10 + $0x60] sm:$0xff]
    %v787 = vld [vmem:[#allocation10 + $0x68] sm:$0xff]
    %v788 = vld [vmem:[#allocation10 + $0x70] sm:$0xff]
    %v789 = vld [vmem:[#allocation10 + $0x78] sm:$0xff]
    %v790 = vld [vmem:[#allocation10 + $0x80] sm:$0xff]
    %v791 = vld [vmem:[#allocation10 + $0x88] sm:$0xff]
    %v792 = vld [vmem:[#allocation10 + $0x90] sm:$0xff]
    %v793 = vld [vmem:[#allocation10 + $0x98] sm:$0xff]
    %v794 = vld [vmem:[#allocation10 + $0xa0] sm:$0xff]
    %v795 = vld [vmem:[#allocation10 + $0xa8] sm:$0xff]
    %v796 = vld [vmem:[#allocation10 + $0xb0] sm:$0xff]
    %v797 = vld [vmem:[#allocation10 + $0xb8] sm:$0xff]
    %v798 = vld [vmem:[#allocation10 + $0xc0] sm:$0xff]
    %v799 = vld [vmem:[#allocation10 + $0xc8] sm:$0xff]
    %v800 = vld [vmem:[#allocation10 + $0xd0] sm:$0xff]
    %v801 = vld [vmem:[#allocation10 + $0xd8] sm:$0xff]
    %v802 = vld [vmem:[#allocation10 + $0xe0] sm:$0xff]
    %v803 = vld [vmem:[#allocation10 + $0xe8] sm:$0xff]
    %v804 = vld [vmem:[#allocation10 + $0xf0] sm:$0xff]
    %v805 = vld [vmem:[#allocation10 + $0xf8] sm:$0xff]
    %v806 = vld [vmem:[#allocation10 + $0x100] sm:$0xff]
    %v807 = vld [vmem:[#allocation10 + $0x108] sm:$0xff]
    %v808 = vld [vmem:[#allocation10 + $0x110] sm:$0xff]
    %v809 = vld [vmem:[#allocation10 + $0x118] sm:$0xff]
    %v810 = vld [vmem:[#allocation10 + $0x120] sm:$0xff]
    %v811 = vld [vmem:[#allocation10 + $0x128] sm:$0xff]
    %v812 = vld [vmem:[#allocation10 + $0x130] sm:$0xff]
    %v813 = vld [vmem:[#allocation10 + $0x138] sm:$0xff]
    %v814 = vld [vmem:[#allocation10 + $0x140] sm:$0xff]
    %v815 = vld [vmem:[#allocation10 + $0x148] sm:$0xff]
    %v816 = vld [vmem:[#allocation10 + $0x150] sm:$0xff]
    %v817 = vld [vmem:[#allocation10 + $0x158] sm:$0xff]
    %v818 = vld [vmem:[#allocation10 + $0x160] sm:$0xff]
    %v819 = vld [vmem:[#allocation10 + $0x168] sm:$0xff]
    %v820 = vld [vmem:[#allocation10 + $0x170] sm:$0xff]
    %v821 = vld [vmem:[#allocation10 + $0x178] sm:$0xff]
    %v822 = vld [vmem:[%s6] sm:$0x1]
    %v824 = vlaneseq
    %v825 = vshrl.u32 %v824, 7
    %v826 = vsub.s32 0, %v825
    %v827 = vrot.slane %v822, %v826
    %829 = vmatprep.subr.mxu0 0.0
    %830 = vmatpush1.msra.mxu0 %v789
    %831 = vmatprep.subr.mxu0 0.0
    %832 = vmatpush1.msra.mxu0 %v788
    %833 = vmatprep.subr.mxu0 0.0
    %834 = vmatpush1.msra.mxu0 %v787
    %835 = vmatprep.subr.mxu0 0.0
    %836 = vmatpush1.msra.mxu0 %v786
    %837 = vmatprep.subr.mxu0 0.0
    %838 = vmatpush1.msra.mxu0 %v785
    %839 = vmatprep.subr.mxu0 0.0
    %840 = vmatpush1.msra.mxu0 %v784
    %841 = vmatprep.subr.mxu0 0.0
    %842 = vmatpush1.msra.mxu0 %v783
    %843 = vmatprep.subr.mxu0 0.0
    %844 = vmatpush1.msra.mxu0 %v782
    %845 = vmatprep.subr.mxu0 0.0
    %846 = vmatpush1.msra.mxu0 %v781
    %847 = vmatprep.subr.mxu0 0.0
    %848 = vmatpush1.msra.mxu0 %v780
    %849 = vmatprep.subr.mxu0 0.0
    %850 = vmatpush1.msra.mxu0 %v779
    %851 = vmatprep.subr.mxu0 0.0
    %852 = vmatpush1.msra.mxu0 %v778
    %853 = vmatprep.subr.mxu0 0.0
    %854 = vmatpush1.msra.mxu0 %v777
    %855 = vmatprep.subr.mxu0 0.0
    %856 = vmatpush1.msra.mxu0 %v776
    %857 = vmatprep.subr.mxu0 0.0
    %858 = vmatpush1.msra.mxu0 %v775
    %859 = vmatprep.subr.mxu0 0.0
    %860 = vmatpush1.msra.mxu0 %v774
    %861 = vmatprep.subr.mxu0 0.0
    %862 = vmatpush2.msra.mxu0 %v805
    %863 = vmatprep.subr.mxu0 0.0
    %864 = vmatpush2.msra.mxu0 %v804
    %865 = vmatprep.subr.mxu0 0.0
    %866 = vmatpush2.msra.mxu0 %v803
    %867 = vmatprep.subr.mxu0 0.0
    %868 = vmatpush2.msra.mxu0 %v802
    %869 = vmatprep.subr.mxu0 0.0
    %870 = vmatpush2.msra.mxu0 %v801
    %871 = vmatprep.subr.mxu0 0.0
    %872 = vmatpush2.msra.mxu0 %v800
    %873 = vmatprep.subr.mxu0 0.0
    %874 = vmatpush2.msra.mxu0 %v799
    %875 = vmatprep.subr.mxu0 0.0
    %876 = vmatpush2.msra.mxu0 %v798
    %877 = vmatprep.subr.mxu0 0.0
    %878 = vmatpush2.msra.mxu0 %v797
    %879 = vmatprep.subr.mxu0 0.0
    %880 = vmatpush2.msra.mxu0 %v796
    %881 = vmatprep.subr.mxu0 0.0
    %882 = vmatpush2.msra.mxu0 %v795
    %883 = vmatprep.subr.mxu0 0.0
    %884 = vmatpush2.msra.mxu0 %v794
    %885 = vmatprep.subr.mxu0 0.0
    %886 = vmatpush2.msra.mxu0 %v793
    %887 = vmatprep.subr.mxu0 0.0
    %888 = vmatpush2.msra.mxu0 %v792
    %889 = vmatprep.subr.mxu0 0.0
    %890 = vmatpush2.msra.mxu0 %v791
    %891 = vmatprep.subr.mxu0 0.0
    %892 = vmatpush2.msra.mxu0 %v790
    %893 = vmatprep.mubr.f32.mxu0 %v772
    %894 = vmatmul.mubr.f32.gmra.mxu0 %v771
    %v895 = vpop.f32.mrf.mxu0
    %v896 = vadd.f32 %v827, %v895
    %v897 = vpop.f32.mrf.mxu0
    %898 = vdwg.mxu0
    %899 = vmatprep.subr.mxu0 0.0
    %900 = vmatpush1.msra.mxu0 %v821
    %901 = vmatprep.subr.mxu0 0.0
    %902 = vmatpush1.msra.mxu0 %v820
    %903 = vmatprep.subr.mxu0 0.0
    %904 = vmatpush1.msra.mxu0 %v819
    %905 = vmatprep.subr.mxu0 0.0
    %906 = vmatpush1.msra.mxu0 %v818
    %907 = vmatprep.subr.mxu0 0.0
    %908 = vmatpush1.msra.mxu0 %v817
    %909 = vmatprep.subr.mxu0 0.0
    %910 = vmatpush1.msra.mxu0 %v816
    %911 = vmatprep.subr.mxu0 0.0
    %912 = vmatpush1.msra.mxu0 %v815
    %913 = vmatprep.subr.mxu0 0.0
    %914 = vmatpush1.msra.mxu0 %v814
    %915 = vmatprep.subr.mxu0 0.0
    %916 = vmatpush1.msra.mxu0 %v813
    %917 = vmatprep.subr.mxu0 0.0
    %918 = vmatpush1.msra.mxu0 %v812
    %919 = vmatprep.subr.mxu0 0.0
    %920 = vmatpush1.msra.mxu0 %v811
    %921 = vmatprep.subr.mxu0 0.0
    %922 = vmatpush1.msra.mxu0 %v810
    %923 = vmatprep.subr.mxu0 0.0
    %924 = vmatpush1.msra.mxu0 %v809
    %925 = vmatprep.subr.mxu0 0.0
    %926 = vmatpush1.msra.mxu0 %v808
    %927 = vmatprep.subr.mxu0 0.0
    %928 = vmatpush1.msra.mxu0 %v807
    %929 = vmatprep.subr.mxu0 0.0
    %930 = vmatpush1.msra.mxu0 %v806
    %931 = vmatprep.subr.mxu0 0.0
    %932 = vmatpush2.msra.mxu0 0.0
    %933 = vmatprep.subr.mxu0 0.0
    %934 = vmatpush2.msra.mxu0 0.0
    %935 = vmatprep.subr.mxu0 0.0
    %936 = vmatpush2.msra.mxu0 0.0
    %937 = vmatprep.subr.mxu0 0.0
    %938 = vmatpush2.msra.mxu0 0.0
    %939 = vmatprep.subr.mxu0 0.0
    %940 = vmatpush2.msra.mxu0 0.0
    %941 = vmatprep.subr.mxu0 0.0
    %942 = vmatpush2.msra.mxu0 0.0
    %943 = vmatprep.subr.mxu0 0.0
    %944 = vmatpush2.msra.mxu0 0.0
    %945 = vmatprep.subr.mxu0 0.0
    %946 = vmatpush2.msra.mxu0 0.0
    %947 = vmatprep.subr.mxu0 0.0
    %948 = vmatpush2.msra.mxu0 0.0
    %949 = vmatprep.subr.mxu0 0.0
    %950 = vmatpush2.msra.mxu0 0.0
    %951 = vmatprep.subr.mxu0 0.0
    %952 = vmatpush2.msra.mxu0 0.0
    %953 = vmatprep.subr.mxu0 0.0
    %954 = vmatpush2.msra.mxu0 0.0
    %955 = vmatprep.subr.mxu0 0.0
    %956 = vmatpush2.msra.mxu0 0.0
    %957 = vmatprep.subr.mxu0 0.0
    %958 = vmatpush2.msra.mxu0 0.0
    %959 = vmatprep.subr.mxu0 0.0
    %960 = vmatpush2.msra.mxu0 0.0
    %961 = vmatprep.subr.mxu0 0.0
    %962 = vmatpush2.msra.mxu0 0.0
    %963 = vmatprep.mubr.f32.mxu0 0.0
    %964 = vmatmul.mubr.f32.gmra.mxu0 %v773
    %v965 = vpop.f32.mrf.mxu0
    %v966 = vadd.f32 %v896, %v965
    %v967 = vpop.f32.mrf.mxu0
    %968 = vdwg.mxu0
    %969 = vst [vmem:[#allocation11] sm:$0xff] %v966
    // Predicated region
    $region50: #{tpu_custom_call.1} parent=1 // pred_check
      _
    $region51: #{tpu_custom_call.1} parent=1 // pred_check_branch
      %971 = sbr.rel (0) target = $region53
    $region52: #{tpu_custom_call.1} parent=1 // pred_region
      %s973 = ssub.s32 128, 128
      %974 = vsyncadd [#allocation4], %s973
      %s976 = sshll.u32 [#allocation11], 4
      %s977 = int_to_ptr.vmem [resolvable:$true] %s976
      %979 = dma.vmem_to_hbm [thread:$0]  %s977, 128, %s7, [#allocation4]
    $region53: #{tpu_custom_call.1} parent=1 // pred_fallthru
      _
    // Predicated region
    $region54: #{tpu_custom_call.1} parent=1 // pred_check
      _
    $region55: #{tpu_custom_call.1} parent=1 // pred_check_branch
      %981 = sbr.rel (0) target = $region57
    $region56: #{tpu_custom_call.1} parent=1 // pred_region
      %982 = dma.done [#allocation4], 128
    $region57: #{tpu_custom_call.1} parent=1 // pred_fallthru
      _
    %983 = vsyncpa [#allocation3], 1
    %984 = vsyncpa [#allocation6], 1
    %985 = vsyncpa [#allocation9], 1
    %986 = vsyncpa [#allocation4], 1

</llo_original>
